<compile_context>
chip_gen: v5e
topology: v5e:2x2
jax: 0.10.0
libtpu: 0.0.40
codegen_flags: <defaults>
</compile_context>

<pallas_src>
import functools

import jax
import jax.numpy as jnp
from jax.experimental import pallas as pl
from jax.experimental.pallas import tpu as pltpu

NEG_SLOPE = 0.01  # PyTorch nn.LeakyReLU default negative_slope


def _down_kernel(x_ref, w_ref, b_ref, o_ref):
    # x_ref: (K, ts)      tap-stacked input tile (K = 4*C_in, ts = spatial tile)
    # w_ref: (C_out, K)   flattened conv weight (same block every step -> resident)
    # b_ref: (C_out, 1)   bias (f32)
    # o_ref: (C_out, ts)  output tile (NCHW: channels x flattened spatial)
    y = jax.lax.dot_general(
        w_ref[...], x_ref[...],
        dimension_numbers=(((1,), (0,)), ((), ())),
        preferred_element_type=jnp.float32,
    )
    y = y + b_ref[...]                        # bias in f32
    y = jnp.where(y > 0, y, NEG_SLOPE * y)    # LeakyReLU in f32
    o_ref[...] = y.astype(o_ref.dtype)


def _pick_spatial_tile(S, K, itemsize, target_bytes=4 * 1024 * 1024, max_tile=4096):
    """Largest lane-friendly divisor of S whose (K, ts) block is ~target_bytes."""
    budget = (target_bytes // max(1, K * itemsize)) // 128 * 128
    budget = max(128, min(max_tile, budget))
    if S <= budget:
        return S
    for t in range(budget, 127, -128):        # multiple-of-128 divisor of S
        if S % t == 0:
            return t
    return S                                   # odd shape: fall back to untiled spatial


@functools.partial(jax.jit, static_argnames=("cast_to_bf16",))
def downsampling_forward(x, weight, bias, *, cast_to_bf16=False):
    """Conv2d(C_in, C_out, kernel_size=2, stride=2) + LeakyReLU.  NCHW in/out."""
    B, C_in, H, W = x.shape
    C_out = weight.shape[0]
    Ho, Wo = H // 2, W // 2
    K = 4 * C_in
    S = Ho * Wo

    # PyTorch floors odd spatial dims for k=2,s=2: drop trailing row/col if odd.
    if H != 2 * Ho or W != 2 * Wo:
        x = x[:, :, : 2 * Ho, : 2 * Wo]

    out_dtype = x.dtype

    # --- single glue pass: tap-stack x into 1x1-conv form (B, K, S) ----------
    # TODO(synk): the stride-2 tap de-interleave cannot be expressed by a
    # BlockSpec index_map, so it remains one XLA transpose pass feeding the kernel.
    xt = x.reshape(B, C_in, Ho, 2, Wo, 2)
    xt = xt.transpose(0, 3, 5, 1, 2, 4).reshape(B, K, S)
    # weight (C_out, C_in, 2, 2) -> (C_out, kh, kw, C_in) -> (C_out, K): same order.
    w2d = weight.transpose(0, 2, 3, 1).reshape(C_out, K)
    b2d = bias.astype(jnp.float32).reshape(C_out, 1)

    if cast_to_bf16:  # halves HBM traffic; accumulation stays f32 in-kernel
        xt = xt.astype(jnp.bfloat16)
        w2d = w2d.astype(jnp.bfloat16)

    ts = _pick_spatial_tile(S, K, xt.dtype.itemsize)
    grid = (B, S // ts)

    cost = pl.CostEstimate(
        flops=2 * B * S * K * C_out,
        transcendentals=0,
        bytes_accessed=int(
            xt.size * xt.dtype.itemsize
            + w2d.size * w2d.dtype.itemsize
            + b2d.size * b2d.dtype.itemsize
            + B * C_out * S * jnp.dtype(out_dtype).itemsize
        ),
    )

    out = pl.pallas_call(
        _down_kernel,
        out_shape=jax.ShapeDtypeStruct((B, C_out, S), out_dtype),
        grid_spec=pltpu.PrefetchScalarGridSpec(
            num_scalar_prefetch=0,
            grid=grid,
            in_specs=[
                pl.BlockSpec((None, K, ts), lambda b, s: (b, 0, s)),   # activations
                pl.BlockSpec((C_out, K), lambda b, s: (0, 0)),         # weight (resident)
                pl.BlockSpec((C_out, 1), lambda b, s: (0, 0)),         # bias (resident)
            ],
            out_specs=pl.BlockSpec((None, C_out, ts), lambda b, s: (b, 0, s)),
        ),
        compiler_params=pltpu.CompilerParams(
            dimension_semantics=("parallel", "parallel"),
            vmem_limit_bytes=48 * 1024 * 1024,
        ),
        cost_estimate=cost,
    )(xt, w2d, b2d)

    # (B, C_out, Ho*Wo) -> (B, C_out, Ho, Wo): free reshape, already NCHW.
    return out.reshape(B, C_out, Ho, Wo)


def _reference(x, weight, bias):
    y = jax.lax.conv_general_dilated(
        x, weight, window_strides=(2, 2), padding="VALID",
        dimension_numbers=("NCHW", "OIHW", "NCHW"))
    y = y + bias.reshape(1, -1, 1, 1)
    return jnp.where(y > 0, y, NEG_SLOPE * y)


if __name__ == "__main__":
    key = jax.random.PRNGKey(0)
    kx, kw, kb = jax.random.split(key, 3)

    B, C_in, C_out, H, W = 2, 4, 8, 16, 16
    x = jax.random.normal(kx, (B, C_in, H, W), dtype=jnp.float32)
    # deterministic synthetic params (Conv2d(C_in, C_out, k=2, s=2) shapes)
    fan_in = C_in * 2 * 2
    bound = 1.0 / (fan_in ** 0.5)
    weight = jax.random.uniform(kw, (C_out, C_in, 2, 2), jnp.float32, -bound, bound)
    bias = jax.random.uniform(kb, (C_out,), jnp.float32, -bound, bound)

    ref = _reference(x, weight, bias)

    # f32 path: exact match vs reference (PyTorch semantics).
    out = jax.block_until_ready(downsampling_forward(x, weight, bias))
    assert out.shape == (B, C_out, H // 2, W // 2), out.shape
    assert jnp.allclose(out, ref, atol=1e-5, rtol=1e-5), "f32 mismatch vs reference"

    # bf16 path (v6e/v7x memory-bound option): f32 accumulation, looser tolerance.
    out_bf16 = jax.block_until_ready(
        downsampling_forward(x, weight, bias, cast_to_bf16=True))
    assert jnp.allclose(out_bf16, ref, atol=5e-2, rtol=5e-2), "bf16 mismatch vs reference"

    print("KERNEL_OK")
</pallas_src>

<mosaic_0001>
module attributes {stable_mosaic.version = 11 : i64} {
  func.func @_down_kernel(%arg0: i32, %arg1: i32, %arg2: memref<1x16x64xf32, #tpu.memory_space<vmem>>, %arg3: memref<8x16xf32, #tpu.memory_space<vmem>>, %arg4: memref<8x1xf32, #tpu.memory_space<vmem>>, %arg5: memref<1x8x64xf32, #tpu.memory_space<vmem>>) attributes {dimension_semantics = [#tpu.dimension_semantics<parallel>, #tpu.dimension_semantics<parallel>], iteration_bounds = array<i64: 2, 1>, scalar_prefetch = 0 : i64, scratch_operands = 0 : i64, tpu.core_type = #tpu.core_type<tc>, window_params = [{transform_indices = @transform_0, window_bounds = array<i64: 1, 16, 64>}, {pipeline_mode = #tpu.pipeline_mode<synchronous>, transform_indices = @transform_1, window_bounds = array<i64: 8, 16>}, {pipeline_mode = #tpu.pipeline_mode<synchronous>, transform_indices = @transform_2, window_bounds = array<i64: 8, 1>}, {transform_indices = @transform_3, window_bounds = array<i64: 1, 8, 64>}]} {
    %c0 = arith.constant 0 : index
    %c0_0 = arith.constant 0 : index
    %0 = vector.load %arg3[%c0, %c0_0] : memref<8x16xf32, #tpu.memory_space<vmem>>, vector<8x16xf32>
    %c0_1 = arith.constant 0 : index
    %c0_2 = arith.constant 0 : index
    %c0_3 = arith.constant 0 : index
    %1 = vector.load %arg2[%c0_1, %c0_2, %c0_3] : memref<1x16x64xf32, #tpu.memory_space<vmem>>, vector<1x16x64xf32>
    %2 = vector.shape_cast %1 : vector<1x16x64xf32> to vector<16x64xf32>
    %cst = arith.constant dense<0.000000e+00> : vector<8x64xf32>
    %3 = tpu.matmul %0, %2, %cst {dimension_numbers = #tpu.dot_dimension_numbers<[1], [0], [0], [1], [0, 0, 1, 1], [], []>} : vector<8x16xf32>, vector<16x64xf32>, vector<8x64xf32> -> vector<8x64xf32>
    %c0_4 = arith.constant 0 : index
    %c0_5 = arith.constant 0 : index
    %4 = vector.load %arg4[%c0_4, %c0_5] : memref<8x1xf32, #tpu.memory_space<vmem>>, vector<8x1xf32>
    %5 = vector.broadcast %4 : vector<8x1xf32> to vector<8x64xf32>
    %6 = arith.addf %3, %5 : vector<8x64xf32>
    %cst_6 = arith.constant 0.000000e+00 : f32
    %7 = vector.broadcast %cst_6 : f32 to vector<8x64xf32>
    %8 = arith.cmpf ogt, %6, %7 : vector<8x64xf32>
    %cst_7 = arith.constant 0.00999999977 : f32
    %9 = vector.broadcast %cst_7 : f32 to vector<8x64xf32>
    %10 = arith.mulf %9, %6 : vector<8x64xf32>
    %11 = arith.select %8, %6, %10 : vector<8x64xi1>, vector<8x64xf32>
    %c0_8 = arith.constant 0 : index
    %c0_9 = arith.constant 0 : index
    %c0_10 = arith.constant 0 : index
    %12 = vector.load %arg5[%c0_8, %c0_9, %c0_10] : memref<1x8x64xf32, #tpu.memory_space<vmem>>, vector<1x8x64xf32>
    %13 = vector.shape_cast %12 : vector<1x8x64xf32> to vector<8x64xf32>
    %14 = vector.shape_cast %11 : vector<8x64xf32> to vector<1x8x64xf32>
    tpu.vector_store %arg5[%c0_8, %c0_9, %c0_10], %14 {strides = array<i32>} : memref<1x8x64xf32, #tpu.memory_space<vmem>>, vector<1x8x64xf32>,
    return
  }
  func.func @transform_0(%arg0: i32, %arg1: i32) -> (i32, i32, i32) {
    %c0_i32 = arith.constant 0 : i32
    %c0_i32_0 = arith.constant 0 : i32
    return %arg0, %c0_i32, %arg1 : i32, i32, i32
  }
  func.func @transform_1(%arg0: i32, %arg1: i32) -> (i32, i32) {
    %c0_i32 = arith.constant 0 : i32
    %c0_i32_0 = arith.constant 0 : i32
    %c0_i32_1 = arith.constant 0 : i32
    return %c0_i32, %c0_i32_0 : i32, i32
  }
  func.func @transform_2(%arg0: i32, %arg1: i32) -> (i32, i32) {
    %c0_i32 = arith.constant 0 : i32
    %c0_i32_0 = arith.constant 0 : i32
    %c0_i32_1 = arith.constant 0 : i32
    return %c0_i32, %c0_i32_0 : i32, i32
  }
  func.func @transform_3(%arg0: i32, %arg1: i32) -> (i32, i32, i32) {
    %c0_i32 = arith.constant 0 : i32
    %c0_i32_0 = arith.constant 0 : i32
    return %arg0, %c0_i32, %arg1 : i32, i32, i32
  }
}

</mosaic_0001>

<llo_original>
// kernel: downsampling_forward.1
$region0: #{downsampling_forward.1}
  #allocation0 [shape = 'u32[]', space=smem, size = 0x4, offset = 0x4, fixed_abs, tag = 'smem constant byte address 0x4 - core index']
  #allocation1 [shape = 'u32[72,128]{1,0:T(1,128)}', space=vmem, size = 0x9000, scoped, tag = 'internal scratch']
  %s0 = inlined_call_operand.vmem [shape: f32[2,16,64], index: 0, kind: input, shape index: {}]
  %s1 = inlined_call_operand.vmem [shape: f32[8,16], index: 1, kind: input, shape index: {}]
  %s2 = inlined_call_operand.vmem [shape: f32[8,1], index: 2, kind: input, shape index: {}]
  %s3 = inlined_call_operand.vmem [shape: f32[2,8,64], index: 3, kind: output, shape index: {}]
  %s4 = sld [smem:[#allocation0]]
  $region45: #{downsampling_forward.1} parent=0
    _
  %s6 = ssub.s32 1, %s4
  %s7 = scalar_select 0, %s6, %s4
  loop: start=0, step=1, limit=4
  $region2: #{downsampling_forward.1} parent=0 // loop_pre_header
    _
  $region3: #{downsampling_forward.1} parent=0 // loop_header
    %s9 = sphi 0, %s13
    %p10 = scmp.ge.s32.totalorder %s9, 4
    %s16 = sphi 0, %s28
    %s17 = sphi 0, %s24
    %s18 = sphi 0, %s16
    %s19 = sphi 0, %s17
    %s20 = sphi 0, %s18
    %s21 = sphi 0, %s19
    %s33 = sphi 0, %s35
    %s36 = sphi 0, %s33
    %s37 = sphi 0, %s36
    %s53 = sphi 0, %s37
    %s57 = sphi 0, %s57
    %s59 = sphi 0, %s57
    %s60 = sphi 0, %s59
    %s74 = sphi 0, %s60
    %s78 = sphi 0, %s78
    %s80 = sphi 0, %s78
    %s81 = sphi 0, %s80
    %s95 = sphi 0, %s81
    %s103 = sphi 0, %s105
    %s106 = sphi 0, %s103
    %s107 = sphi 0, %s106
    %s123 = sphi 0, %s107
  $region4: #{downsampling_forward.1} parent=0 // loop_header_branch
    %12 = sbr.rel (%p10) target = $region8
  $region5: #{downsampling_forward.1} parent=0 // loop_body
    %s14 = ssub.s32 %s9, 1
    %s15 = ssub.s32 %s9, 2
    %s22 = sadd.s32 1, %s17
    %p23 = scmp.ge.s32.totalorder %s22, 1
    %s24 = scalar_select %p23, 0, %s22
    %s25 = sadd.s32 1, %s16
    %s26 = scalar_select %p23, %s25, %s16
    %p27 = scmp.ge.s32.totalorder %s26, 2
    %s28 = scalar_select %p27, 0, %s26
    %s29 = ssub.s32 %s16, %s28
    %s30 = ssub.s32 %s17, %s24
    %s31 = sor.u32 %s29, %s30
    %p32 = scmp.eq.s32.totalorder %s31, 0
    %s34 = sadd.s32 %s33, 1
    %s35 = scalar_select %p32, %s33, %s34
    %p38 = pneg %p32
    %p39 = scmp.eq.s32.totalorder %s9, 1
    %p40 = por %p38, %p39
    %p41 = scmp.ne.s32.totalorder %s33, %s36
    %p42 = scmp.eq.s32.totalorder %s9, 0
    %p43 = por %p41, %p42
    %p44 = scmp.ne.s32.totalorder %s33, %s36
    %p45 = scmp.eq.s32.totalorder %s14, 1
    %p46 = por %p44, %p45
    %p47 = scmp.ne.s32.totalorder %s36, %s37
    %p48 = scmp.eq.s32.totalorder %s14, 0
    %p49 = por %p47, %p48
    %p50 = scmp.ne.s32.totalorder %s36, %s37
    %p51 = scmp.eq.s32.totalorder %s15, 1
    %p52 = por %p50, %p51
    %p54 = scmp.ne.s32.totalorder %s37, %s53
    %p55 = scmp.eq.s32.totalorder %s15, 0
    %p56 = por %p54, %p55
    %s58 = sadd.s32 %s57, 1
    %p61 = scmp.eq.s32.totalorder %s9, 1
    %p62 = scmp.ne.s32.totalorder %s57, %s59
    %p63 = scmp.eq.s32.totalorder %s9, 0
    %p64 = por %p62, %p63
    %p65 = scmp.ne.s32.totalorder %s57, %s59
    %p66 = scmp.eq.s32.totalorder %s14, 1
    %p67 = por %p65, %p66
    %p68 = scmp.ne.s32.totalorder %s59, %s60
    %p69 = scmp.eq.s32.totalorder %s14, 0
    %p70 = por %p68, %p69
    %p71 = scmp.ne.s32.totalorder %s59, %s60
    %p72 = scmp.eq.s32.totalorder %s15, 1
    %p73 = por %p71, %p72
    %p75 = scmp.ne.s32.totalorder %s60, %s74
    %p76 = scmp.eq.s32.totalorder %s15, 0
    %p77 = por %p75, %p76
    %s79 = sadd.s32 %s78, 1
    %p82 = scmp.eq.s32.totalorder %s9, 1
    %p83 = scmp.ne.s32.totalorder %s78, %s80
    %p84 = scmp.eq.s32.totalorder %s9, 0
    %p85 = por %p83, %p84
    %p86 = scmp.ne.s32.totalorder %s78, %s80
    %p87 = scmp.eq.s32.totalorder %s14, 1
    %p88 = por %p86, %p87
    %p89 = scmp.ne.s32.totalorder %s80, %s81
    %p90 = scmp.eq.s32.totalorder %s14, 0
    %p91 = por %p89, %p90
    %p92 = scmp.ne.s32.totalorder %s80, %s81
    %p93 = scmp.eq.s32.totalorder %s15, 1
    %p94 = por %p92, %p93
    %p96 = scmp.ne.s32.totalorder %s81, %s95
    %p97 = scmp.eq.s32.totalorder %s15, 0
    %p98 = por %p96, %p97
    %s99 = ssub.s32 %s16, %s28
    %s100 = ssub.s32 %s17, %s24
    %s101 = sor.u32 %s99, %s100
    %p102 = scmp.eq.s32.totalorder %s101, 0
    %s104 = sadd.s32 %s103, 1
    %s105 = scalar_select %p102, %s103, %s104
    %p108 = pneg %p102
    %p109 = scmp.eq.s32.totalorder %s9, 1
    %p110 = por %p108, %p109
    %p111 = scmp.ne.s32.totalorder %s103, %s106
    %p112 = scmp.eq.s32.totalorder %s9, 0
    %p113 = por %p111, %p112
    %p114 = scmp.ne.s32.totalorder %s103, %s106
    %p115 = scmp.eq.s32.totalorder %s14, 1
    %p116 = por %p114, %p115
    %p117 = scmp.ne.s32.totalorder %s106, %s107
    %p118 = scmp.eq.s32.totalorder %s14, 0
    %p119 = por %p117, %p118
    %p120 = scmp.ne.s32.totalorder %s106, %s107
    %p121 = scmp.eq.s32.totalorder %s15, 1
    %p122 = por %p120, %p121
    %p124 = scmp.ne.s32.totalorder %s107, %s123
    %p125 = scmp.eq.s32.totalorder %s15, 0
    %p126 = por %p124, %p125
    %p127 = scmp.le.s32.totalorder 1, %s9
    %p128 = scmp.lt.s32.totalorder %s9, 3
    %p129 = pnand %p127, %p128
    %p130 = pneg %p129
    // Predicated region
    $region9: #{downsampling_forward.1} parent=5 // pred_check
      _
    $region10: #{downsampling_forward.1} parent=5 // pred_check_branch
      %132 = sbr.rel (%p129) target = $region12
    $region11: #{downsampling_forward.1} parent=5 // pred_region
      %s133 = ssub.s32 %s9, 1
      // Predicated region
      $region13: #{downsampling_forward.1} parent=11 // pred_check
        %p134 = pneg %p70
      $region14: #{downsampling_forward.1} parent=11 // pred_check_branch
        %136 = sbr.rel (%p134) target = $region16
      $region15: #{downsampling_forward.1} parent=11 // pred_region
        _
      $region16: #{downsampling_forward.1} parent=11 // pred_fallthru
        _
      // Predicated region
      $region17: #{downsampling_forward.1} parent=11 // pred_check
        %p137 = pneg %p91
      $region18: #{downsampling_forward.1} parent=11 // pred_check_branch
        %139 = sbr.rel (%p137) target = $region20
      $region19: #{downsampling_forward.1} parent=11 // pred_region
        _
      $region20: #{downsampling_forward.1} parent=11 // pred_fallthru
        _
    $region12: #{downsampling_forward.1} parent=5 // pred_fallthru
      _
    %p140 = scmp.lt.s32.totalorder %s9, 2
    // Predicated region
    $region21: #{downsampling_forward.1} parent=5 // pred_check
      %p141 = pneg %p140
    $region22: #{downsampling_forward.1} parent=5 // pred_check_branch
      %143 = sbr.rel (%p141) target = $region24
    $region23: #{downsampling_forward.1} parent=5 // pred_region
      // Predicated region
      $region25: #{downsampling_forward.1} parent=23 // pred_check
        %p144 = pneg %p43
      $region26: #{downsampling_forward.1} parent=23 // pred_check_branch
        %146 = sbr.rel (%p144) target = $region28
      $region27: #{downsampling_forward.1} parent=23 // pred_region
        %p147 = scmp.lt.s32.totalorder %s16, 1
        %s148 = scalar_select %p147, %s16, 1
        %p149 = scmp.lt.s32.totalorder %s17, 0
        %s150 = scalar_select %p149, %s17, 0
        %s151 = smul.addr %s148, 2
        %s152 = sadd.s32 %s150, %s151
        %s153 = smul.addr %s152, 8
        %s154 = scalar_lea.vmem %s0, %s153
      $region28: #{downsampling_forward.1} parent=23 // pred_fallthru
        _
    $region24: #{downsampling_forward.1} parent=5 // pred_fallthru
      _
    %p155 = scmp.le.s32.totalorder 1, %s9
    %p156 = scmp.lt.s32.totalorder %s9, 3
    %p157 = pnand %p155, %p156
    %p158 = pneg %p157
    // Predicated region
    $region29: #{downsampling_forward.1} parent=5 // pred_check
      _
    $region30: #{downsampling_forward.1} parent=5 // pred_check_branch
      %160 = sbr.rel (%p157) target = $region32
    $region31: #{downsampling_forward.1} parent=5 // pred_region
      %s161 = ssub.s32 %s9, 1
      %p162 = scmp.lt.s32.totalorder %s18, 1
      %s163 = scalar_select %p162, %s18, 1
      %p164 = scmp.lt.s32.totalorder %s19, 0
      %s165 = scalar_select %p164, %s19, 0
      %s166 = smul.addr %s163, 2
      %s167 = sadd.s32 %s165, %s166
      %s168 = smul.addr %s167, 8
      %s169 = scalar_lea.vmem %s0, %s168
      %p170 = pneg %p49
      %p171 = pneg %p46
      %p172 = pneg %p70
      %p173 = pneg %p67
      %p174 = pneg %p91
      %p175 = pneg %p88
      %p176 = pneg %p119
      %p177 = pneg %p116
      %p178 = scmp.lt.s32.totalorder %s18, 1
      %s179 = scalar_select %p178, %s18, 1
      %p180 = scmp.lt.s32.totalorder %s19, 0
      %s181 = scalar_select %p180, %s19, 0
      %s182 = sadd.s32 %s181, %s179
      %s183 = smul.addr %s182, 8
      %s184 = scalar_lea.vmem %s3, %s183
      %p185 = scmp.lt.s32.totalorder %s18, 1
      %s186 = scalar_select %p185, %s18, 1
      %p187 = scmp.lt.s32.totalorder %s19, 0
      %s188 = scalar_select %p187, %s19, 0
      %s189 = smul.addr %s186, 2
      %s190 = sadd.s32 %s188, %s189
      %s191 = smul.addr %s190, 8
      %s192 = scalar_lea.vmem %s0, %s191
      %p193 = scmp.lt.s32.totalorder %s18, 1
      %s194 = scalar_select %p193, %s18, 1
      %p195 = scmp.lt.s32.totalorder %s19, 0
      %s196 = scalar_select %p195, %s19, 0
      %s197 = sadd.s32 %s196, %s194
      %s198 = smul.addr %s197, 8
      %s199 = scalar_lea.vmem %s3, %s198
      %v200 = vld [vmem:[%s1] sm:$0xff]
      %v201 = vld [vmem:[%s192] sm:$0xff]
      %v202 = vld [vmem:[%s192 + $0x8] sm:$0xff]
      %v203 = vld [vmem:[%s2] sm:$0xff]
      %205 = vset.pattern.permute.xlu0 0
      %206 = vperm.xlu0 %205, %v203
      %v207 = vpop.permute.xlu0 %206
      %vm209 = vcmask 130048
      %v211 = vsel %vm209, %v200, 0
      %213 = vmatpush.msra.mxu0 0.0
      %214 = vmatpush.msra.mxu0 0.0
      %215 = vmatpush.msra.mxu0 0.0
      %216 = vmatpush.msra.mxu0 0.0
      %217 = vmatpush.msra.mxu0 0.0
      %218 = vmatpush.msra.mxu0 0.0
      %219 = vmatpush.msra.mxu0 0.0
      %220 = vmatpush.msra.mxu0 0.0
      %221 = vmatpush.msra.mxu0 0.0
      %222 = vmatpush.msra.mxu0 0.0
      %223 = vmatpush.msra.mxu0 0.0
      %224 = vmatpush.msra.mxu0 0.0
      %225 = vmatpush.msra.mxu0 0.0
      %226 = vmatpush.msra.mxu0 0.0
      %227 = vmatpush.msra.mxu0 %v202
      %228 = vmatpush.msra.mxu0 %v201
      %229 = vmatmul.f32.gmra.mxu0 %v211
      %v230 = vpop.f32.mrf.mxu0
      %v231 = vadd.f32 %v207, %v230
      %232 = vdwg.mxu0
      %vm233 = vcmp.gt.f32.partialorder %v231, 0.0
      %v234 = vmul.f32 %v231, 0.01
      %v235 = vsel %vm233, %v231, %v234
      %vm236 = vcmask 523264
      %237 = vst.msk [vmem:[%s199] sm:$0xff] %vm236, %v235
      %p238 = scmp.lt.s32.totalorder %s18, 1
      %s239 = scalar_select %p238, %s18, 1
      %p240 = scmp.lt.s32.totalorder %s19, 0
      %s241 = scalar_select %p240, %s19, 0
      %s242 = sadd.s32 %s241, %s239
      %s243 = smul.addr %s242, 8
      %s244 = scalar_lea.vmem %s3, %s243
      // Predicated region
      $region33: #{downsampling_forward.1} parent=31 // pred_check
        %p245 = pneg %p116
      $region34: #{downsampling_forward.1} parent=31 // pred_check_branch
        %247 = sbr.rel (%p245) target = $region36
      $region35: #{downsampling_forward.1} parent=31 // pred_region
        _
      $region36: #{downsampling_forward.1} parent=31 // pred_fallthru
        _
    $region32: #{downsampling_forward.1} parent=5 // pred_fallthru
      _
    %p248 = scmp.le.s32.totalorder 2, %s9
    // Predicated region
    $region37: #{downsampling_forward.1} parent=5 // pred_check
      %p249 = pneg %p248
    $region38: #{downsampling_forward.1} parent=5 // pred_check_branch
      %251 = sbr.rel (%p249) target = $region40
    $region39: #{downsampling_forward.1} parent=5 // pred_region
      %s252 = ssub.s32 %s9, 2
      // Predicated region
      $region41: #{downsampling_forward.1} parent=39 // pred_check
        %p253 = pneg %p122
      $region42: #{downsampling_forward.1} parent=39 // pred_check_branch
        %255 = sbr.rel (%p253) target = $region44
      $region43: #{downsampling_forward.1} parent=39 // pred_region
        %p256 = scmp.lt.s32.totalorder %s20, 1
        %s257 = scalar_select %p256, %s20, 1
        %p258 = scmp.lt.s32.totalorder %s21, 0
        %s259 = scalar_select %p258, %s21, 0
        %s260 = sadd.s32 %s259, %s257
        %s261 = smul.addr %s260, 8
        %s262 = scalar_lea.vmem %s3, %s261
      $region44: #{downsampling_forward.1} parent=39 // pred_fallthru
        _
    $region40: #{downsampling_forward.1} parent=5 // pred_fallthru
      _
  $region6: #{downsampling_forward.1} parent=0 // loop_footer
    %s13 = sadd.s32 1, %s9
  $region7: #{downsampling_forward.1} parent=0 // loop_footer_branch
    %8 = sbr.rel target = $region3
  $region8: #{downsampling_forward.1} parent=0 // loop_exit
    _

</llo_original>
